<compile_context>
chip_gen: v7x
topology: tpu7x:2x2x1
jax: 0.10.0
libtpu: 0.0.40
codegen_flags: <defaults>
</compile_context>

<pallas_src>
import numpy as np
import jax
import jax.numpy as jnp
from jax.experimental import pallas as pl
from jax.experimental.pallas import tpu as pltpu


_SUBLANE = 8
_LANE = 128
_MIB = 1024 * 1024


def _round_up(x: int, m: int) -> int:
    return ((x + m - 1) // m) * m


def _tpu_generation_budget():
    """(vmem_limit_bytes, per-step x-tile byte target) chosen per TPU generation."""
    try:
        kind = jax.devices()[0].device_kind.lower()
    except Exception:
        kind = ""
    if ("v7" in kind) or ("7x" in kind) or (kind == ""):
        # v7x: 64 MiB physical VMEM -> leave headroom; 3.2 TB/s HBM wants ~4 MiB DMAs.
        return 40 * _MIB, 4 * _MIB
    # v5e / v6e: 128 MiB physical VMEM (scoped defaults 16 / 32 MiB -> raise explicitly).
    return 96 * _MIB, 2 * _MIB


def _loss_tile_kernel(sa_ref, sb_ref, x_ref, o_ref):
    """One (key k, lane-tile j) grid step.  Grid = (K, Np // TN), both parallel.

    sa_ref: (Mp, 1)   f32        sigmoid(alpha.weight) for key k, zero-padded rows
    sb_ref: (1, TN)   f32        lane tile j of sigmoid(beta.weight), zero-padded cols
    x_ref:  (Mp, TN)  bf16/f32   lane tile j of the zero-padded target
    o_ref:  (8, 128)  f32        partial sum of squared residuals, lane-dense broadcast
    """
    Mp, TN = x_ref.shape
    pred = sa_ref[...] * sb_ref[...]                          # rank-1 outer product (VPU broadcast mul)
    d = pred - x_ref[...].astype(jnp.float32)
    d2 = d * d
    # Fold to one (8, 128) vreg with pure VPU adds (layout-free splits of lane / sublane
    # blocks), then a single small XLU reduce -- no per-step full reduction tree.
    y = d2.reshape(Mp, TN // _LANE, _LANE).sum(axis=1)        # (Mp, 128)
    z = y.reshape(Mp // _SUBLANE, _SUBLANE, _LANE).sum(axis=0)  # (8, 128)
    ssq = jnp.sum(z, keepdims=True)                           # (1, 1)
    o_ref[...] = jnp.broadcast_to(ssq, o_ref.shape)           # lane-dense (unmasked) store


class ActionModelPallas:
    """JAX/Pallas port of ActionModelModule (forward pass)."""

    def __init__(self, name_key2shape: dict, key: jax.Array,
                 target_dtype=jnp.bfloat16):
        self._target_dtype = jnp.dtype(target_dtype)
        self._key_order = []
        self._raw_params = {}
        shapes = []
        for action_name_key, shape in name_key2shape.items():
            if shape[1] == 0:
                continue
            M, N = int(shape[0]), int(shape[1])
            key, ka, kb = jax.random.split(key, 3)
            # nn.Linear-style init: alpha.weight (M,1) ~ U(-1,1) (fan_in=1),
            # beta.weight (1,N) ~ U(-1/sqrt(N), 1/sqrt(N)).
            alpha_w = jax.random.uniform(ka, (M, 1), jnp.float32, -1.0, 1.0)
            bound = 1.0 / float(N) ** 0.5
            beta_w = jax.random.uniform(kb, (1, N), jnp.float32, -bound, bound)
            self._key_order.append(action_name_key)
            self._raw_params[action_name_key] = (alpha_w, beta_w)
            shapes.append((M, N))

        self._num_keys = len(self._key_order)
        if self._num_keys == 0:
            return

        Mmax = max(m for m, _ in shapes)
        Nmax = max(n for _, n in shapes)
        Mp = _round_up(Mmax, _SUBLANE)
        vmem_limit, tile_byte_target = _tpu_generation_budget()
        x_bpe = self._target_dtype.itemsize

        # ---- lane-tile sizing: aim for ~tile_byte_target per x tile, cap by VMEM budget.
        Np_base = _round_up(Nmax, _LANE)
        # double-buffered sa + out blocks + ~2 MiB Mosaic slack; x and sb scale with TN.
        fixed = 2 * Mp * 4 + 2 * _SUBLANE * _LANE * 4 + 2 * _MIB
        per_lane = 2 * (Mp * x_bpe + 4)                   # double-buffered x + sb, per lane
        avail = (vmem_limit * 8) // 10 - fixed
        tn_fit = max(_LANE, (avail // per_lane) // _LANE * _LANE)
        tn_target = max(_LANE, _round_up(-(-tile_byte_target // (Mp * x_bpe)), _LANE))
        TN = min(tn_target, tn_fit)
        if TN >= Np_base:
            TN, Np, n_tiles = Np_base, Np_base, 1
        else:
            Np = _round_up(Nmax, TN)
            n_tiles = Np // TN
        # TODO(synk): for very large M also tile the sublane (Mp) axis as a third parallel
        # grid axis; partial sums of squares are already reduced outside the kernel.
        self._Mp, self._Np, self._TN = Mp, Np, TN

        # Parameters are fixed in forward(), so hoist ALL sigmoids out of the kernel and
        # pad the sigmoided factors with exact 0.0 -> padded cells have pred == target == 0
        # regardless of the target dtype.
        sa_stack, sb_stack = [], []
        for name in self._key_order:
            aw, bw = self._raw_params[name]
            M, N = aw.shape[0], bw.shape[1]
            sa_stack.append(jnp.pad(jax.nn.sigmoid(aw), ((0, Mp - M), (0, 0))))
            sb_stack.append(jnp.pad(jax.nn.sigmoid(bw), ((0, 0), (0, Np - N))))
        self._sa_stack = jnp.stack(sa_stack)      # (K, Mp, 1)  f32
        self._sb_stack = jnp.stack(sb_stack)      # (K, 1, Np)  f32

        K = self._num_keys
        # TODO(synk): sweep pipeline_mode=pl.Buffered(3) on the x spec per generation once
        # TN is large; only the x stream needs extra depth (sa/sb tiles are tiny).
        self._kernel_call = pl.pallas_call(
            _loss_tile_kernel,
            out_shape=jax.ShapeDtypeStruct((K, n_tiles, _SUBLANE, _LANE), jnp.float32),
            grid=(K, n_tiles),
            in_specs=[
                pl.BlockSpec((None, Mp, 1), lambda k, j: (k, 0, 0)),
                pl.BlockSpec((None, 1, TN), lambda k, j: (k, 0, j)),
                pl.BlockSpec((None, Mp, TN), lambda k, j: (k, 0, j)),
            ],
            out_specs=pl.BlockSpec((None, None, _SUBLANE, _LANE),
                                   lambda k, j: (k, j, 0, 0)),
            compiler_params=pltpu.CompilerParams(
                dimension_semantics=("parallel", "parallel"),
                vmem_limit_bytes=vmem_limit),
        )

        target_dt = self._target_dtype

        def _prepare(xs):
            # Pad + stack the raw targets into the kernel's (K, Mp, Np) layout, already in
            # the narrow kernel dtype (half-width copy).  Ideally done ONCE by the input
            # pipeline -- see prepare_inputs() / forward_prepared().
            return jnp.stack([
                jnp.pad(x.astype(target_dt),
                        ((0, Mp - x.shape[0]), (0, Np - x.shape[1])))
                for x in xs])

        def _forward_from_stack(sa, sb, x_stack):
            parts = self._kernel_call(sa, sb, x_stack)        # (K, n_tiles, 8, 128)
            ssq = parts[:, :, 0, 0].sum(axis=1)               # per-key sum of squares
            return jnp.sum(jnp.sqrt(ssq))                     # sum_k ||pred_k - x_k||_F

        self._prepare_jit = jax.jit(_prepare)
        self._fwd_prepared_jit = jax.jit(_forward_from_stack)
        self._fwd_jit = jax.jit(
            lambda sa, sb, xs: _forward_from_stack(sa, sb, _prepare(xs)))

    # --- input-pipeline path (no per-forward pad/stack copy inside forward) ------------
    def prepare_inputs(self, inp: dict) -> jax.Array:
        xs = tuple(inp[name] for name in self._key_order)
        return self._prepare_jit(xs)

    def forward_prepared(self, x_stack: jax.Array) -> jax.Array:
        return self._fwd_prepared_jit(self._sa_stack, self._sb_stack, x_stack)

    # --- dict-based forward (prep fused into the same jit) ------------------------------
    def forward(self, inp: dict) -> jax.Array:
        if self._num_keys == 0:
            return jnp.float32(0.0)
        xs = tuple(inp[name] for name in self._key_order)
        return self._fwd_jit(self._sa_stack, self._sb_stack, xs)

    def forward_reference(self, inp: dict) -> jax.Array:
        """Pure-JAX reference for validation."""
        losses = jnp.float32(0.0)
        for name, (aw, bw) in self._raw_params.items():
            pred = jax.nn.sigmoid(aw) @ jax.nn.sigmoid(bw)
            losses = losses + jnp.linalg.norm(pred - inp[name])
        return losses

    def get_ratio(self):
        return {name: np.asarray(jax.nn.sigmoid(bw))
                for name, (_, bw) in self._raw_params.items()}


if __name__ == "__main__":
    root = jax.random.PRNGKey(0)
    k_params, k_in = jax.random.split(root)

    # small, shape-diverse action spec; the 0-width entry must be skipped
    name_key2shape = {
        "move": (16, 32),
        "attack": (8, 128),
        "noop": (4, 0),      # skipped (shape[1] == 0), as in the PyTorch module
        "cast": (32, 16),
    }

    inp = {}
    for name, shape in name_key2shape.items():
        if shape[1] == 0:
            continue
        k_in, sub = jax.random.split(k_in)
        inp[name] = jax.random.normal(sub, shape, jnp.float32)

    # f32-target model: tight check against the pure-JAX reference.
    model_f32 = ActionModelPallas(name_key2shape, k_params, target_dtype=jnp.float32)
    loss_f32 = jax.block_until_ready(model_f32.forward(inp))
    ref = jax.block_until_ready(model_f32.forward_reference(inp))
    assert jnp.allclose(loss_f32, ref, rtol=1e-5, atol=1e-5), (loss_f32, ref)

    # Default bf16-target model (halves the dominant HBM stream); matches to bf16 tolerance.
    model = ActionModelPallas(name_key2shape, k_params)
    loss_bf16 = jax.block_until_ready(model.forward(inp))
    assert jnp.allclose(loss_bf16, ref, rtol=2e-2, atol=1e-3), (loss_bf16, ref)

    # Pre-prepared (input-pipeline) path: no pad/stack copy inside forward.
    x_stack = jax.block_until_ready(model.prepare_inputs(inp))
    loss_prep = jax.block_until_ready(model.forward_prepared(x_stack))
    assert jnp.allclose(loss_prep, loss_bf16, rtol=1e-5, atol=1e-6), (loss_prep, loss_bf16)

    print("KERNEL_OK")
</pallas_src>

<mosaic_0001>
module attributes {stable_mosaic.version = 11 : i64} {
  func.func @_loss_tile_kernel(%arg0: i32, %arg1: i32, %arg2: memref<1x32x1xf32, #tpu.memory_space<vmem>>, %arg3: memref<1x1x128xf32, #tpu.memory_space<vmem>>, %arg4: memref<1x32x128xf32, #tpu.memory_space<vmem>>, %arg5: memref<1x1x8x128xf32, #tpu.memory_space<vmem>>) attributes {dimension_semantics = [#tpu.dimension_semantics<parallel>, #tpu.dimension_semantics<parallel>], iteration_bounds = array<i64: 3, 1>, scalar_prefetch = 0 : i64, scratch_operands = 0 : i64, tpu.core_type = #tpu.core_type<tc>, window_params = [{transform_indices = @transform_0, window_bounds = array<i64: 1, 32, 1>}, {transform_indices = @transform_1, window_bounds = array<i64: 1, 1, 128>}, {transform_indices = @transform_2, window_bounds = array<i64: 1, 32, 128>}, {transform_indices = @transform_3, window_bounds = array<i64: 1, 1, 8, 128>}]} {
    %c0 = arith.constant 0 : index
    %c0_0 = arith.constant 0 : index
    %c0_1 = arith.constant 0 : index
    %0 = vector.load %arg2[%c0, %c0_0, %c0_1] : memref<1x32x1xf32, #tpu.memory_space<vmem>>, vector<1x32x1xf32>
    %1 = vector.shape_cast %0 : vector<1x32x1xf32> to vector<32x1xf32>
    %c0_2 = arith.constant 0 : index
    %c0_3 = arith.constant 0 : index
    %c0_4 = arith.constant 0 : index
    %2 = vector.load %arg3[%c0_2, %c0_3, %c0_4] : memref<1x1x128xf32, #tpu.memory_space<vmem>>, vector<1x1x128xf32>
    %3 = vector.shape_cast %2 : vector<1x1x128xf32> to vector<1x128xf32>
    %4 = vector.broadcast %1 : vector<32x1xf32> to vector<32x128xf32>
    %5 = vector.broadcast %3 : vector<1x128xf32> to vector<32x128xf32>
    %6 = arith.mulf %4, %5 : vector<32x128xf32>
    %c0_5 = arith.constant 0 : index
    %c0_6 = arith.constant 0 : index
    %c0_7 = arith.constant 0 : index
    %7 = vector.load %arg4[%c0_5, %c0_6, %c0_7] : memref<1x32x128xf32, #tpu.memory_space<vmem>>, vector<1x32x128xf32>
    %8 = vector.shape_cast %7 : vector<1x32x128xf32> to vector<32x128xf32>
    %9 = arith.subf %6, %8 : vector<32x128xf32>
    %10 = arith.mulf %9, %9 : vector<32x128xf32>
    %11 = vector.shape_cast %10 : vector<32x128xf32> to vector<32x1x128xf32>
    %cst = arith.constant dense<0.000000e+00> : vector<32x128xf32>
    %12 = vector.multi_reduction <add>, %11, %cst [1] : vector<32x1x128xf32> to vector<32x128xf32>
    %13 = vector.shape_cast %12 : vector<32x128xf32> to vector<4x8x128xf32>
    %cst_8 = arith.constant dense<0.000000e+00> : vector<8x128xf32>
    %14 = vector.multi_reduction <add>, %13, %cst_8 [0] : vector<4x8x128xf32> to vector<8x128xf32>
    %15 = vector.shape_cast %14 : vector<8x128xf32> to vector<1x8x128xf32>
    %cst_9 = arith.constant dense<0.000000e+00> : vector<1xf32>
    %16 = vector.multi_reduction <add>, %15, %cst_9 [1, 2] : vector<1x8x128xf32> to vector<1xf32>
    %17 = vector.shape_cast %16 : vector<1xf32> to vector<1x1x1xf32>
    %18 = vector.extract %17[0, 0, 0] : f32 from vector<1x1x1xf32>
    %19 = vector.broadcast %18 : f32 to vector<1x1xf32>
    %20 = vector.shape_cast %19 : vector<1x1xf32> to vector<1x1xf32>
    %21 = vector.broadcast %20 : vector<1x1xf32> to vector<8x128xf32>
    %c0_10 = arith.constant 0 : index
    %c0_11 = arith.constant 0 : index
    %c0_12 = arith.constant 0 : index
    %c0_13 = arith.constant 0 : index
    %22 = vector.load %arg5[%c0_10, %c0_11, %c0_12, %c0_13] : memref<1x1x8x128xf32, #tpu.memory_space<vmem>>, vector<1x1x8x128xf32>
    %23 = vector.shape_cast %22 : vector<1x1x8x128xf32> to vector<8x128xf32>
    %24 = vector.shape_cast %21 : vector<8x128xf32> to vector<1x1x8x128xf32>
    tpu.vector_store %arg5[%c0_10, %c0_11, %c0_12, %c0_13], %24 {strides = array<i32>} : memref<1x1x8x128xf32, #tpu.memory_space<vmem>>, vector<1x1x8x128xf32>,
    return
  }
  func.func @transform_0(%arg0: i32, %arg1: i32) -> (i32, i32, i32) {
    %c0_i32 = arith.constant 0 : i32
    %c0_i32_0 = arith.constant 0 : i32
    %c0_i32_1 = arith.constant 0 : i32
    return %arg0, %c0_i32, %c0_i32_0 : i32, i32, i32
  }
  func.func @transform_1(%arg0: i32, %arg1: i32) -> (i32, i32, i32) {
    %c0_i32 = arith.constant 0 : i32
    %c0_i32_0 = arith.constant 0 : i32
    return %arg0, %c0_i32, %arg1 : i32, i32, i32
  }
  func.func @transform_2(%arg0: i32, %arg1: i32) -> (i32, i32, i32) {
    %c0_i32 = arith.constant 0 : i32
    %c0_i32_0 = arith.constant 0 : i32
    return %arg0, %c0_i32, %arg1 : i32, i32, i32
  }
  func.func @transform_3(%arg0: i32, %arg1: i32) -> (i32, i32, i32, i32) {
    %c0_i32 = arith.constant 0 : i32
    %c0_i32_0 = arith.constant 0 : i32
    %c0_i32_1 = arith.constant 0 : i32
    return %arg0, %arg1, %c0_i32, %c0_i32_0 : i32, i32, i32, i32
  }
}

</mosaic_0001>

<llo_original>
// kernel: _lambda_.1
$region0: #{_lambda_.1}
  #allocation0 [shape = 'u32[]', space=smem, size = 0x4, offset = 0x4, fixed_abs, tag = 'smem constant byte address 0x4 - core index']
  #allocation1 [shape = 'u32[144,128]{1,0:T(1,128)}', space=vmem, size = 0x12000, scoped, tag = 'internal scratch']
  %s0 = inlined_call_operand.hbm [shape: f32[3,32,1], index: 0, kind: input, shape index: {}]
  %s1 = inlined_call_operand.hbm [shape: f32[3,1,128], index: 1, kind: input, shape index: {}]
  %s2 = inlined_call_operand.hbm [shape: f32[3,32,128], index: 2, kind: input, shape index: {}]
  %s3 = inlined_call_operand.hbm [shape: f32[3,1,8,128], index: 3, kind: output, shape index: {}]
  %s4 = sld [smem:[#allocation0]]
  $region57: #{_lambda_.1} parent=0
    _
  %s6 = ssub.s32 1, %s4
  %s7 = scalar_select 0, %s6, %s4
  $region1: #{_lambda_.1} parent=0
    #allocation2 [shape = 'u8[32768]{0}', space=vmem, size = 0x8000, scoped, tag = 'input window, operand 0']
    #allocation3 [shape = 's32[2]{0}', space=sflag, size = 0x8, scoped, tag = 'scoped memory for _lambda_.1']
    #allocation4 [shape = 's32[2]{0}', space=sflag, size = 0x8, scoped, tag = 'scoped memory for _lambda_.1']
    #allocation5 [shape = 'u8[1024]{0}', space=vmem, size = 0x400, scoped, tag = 'input window, operand 1']
    #allocation6 [shape = 's32[2]{0}', space=sflag, size = 0x8, scoped, tag = 'scoped memory for _lambda_.1']
    #allocation7 [shape = 'u8[32768]{0}', space=vmem, size = 0x8000, scoped, tag = 'input window, operand 2']
    #allocation8 [shape = 'u8[8192]{0}', space=vmem, size = 0x2000, scoped, tag = 'output window, operand 0']
    %8 = vsyncpa [#allocation3], 0
    %s9 = scalar_lea.sflag [#allocation3], 1
    %10 = vsyncpa %s9, 0
    %11 = vsyncpa [#allocation6], 0
    %s12 = scalar_lea.sflag [#allocation6], 1
    %13 = vsyncpa %s12, 0
    %14 = vsyncpa [#allocation4], 0
    %s15 = scalar_lea.sflag [#allocation4], 1
    %16 = vsyncpa %s15, 0
    loop: start=0, step=1, limit=5
    $region2: #{_lambda_.1} parent=1 // loop_pre_header
      _
    $region3: #{_lambda_.1} parent=1 // loop_header
      %s18 = sphi 0, %s22
      %p19 = scmp.ge.s32.totalorder %s18, 5
      %s25 = sphi 0, %s37
      %s26 = sphi 0, %s33
      %s27 = sphi 0, %s25
      %s28 = sphi 0, %s26
      %s29 = sphi 0, %s27
      %s30 = sphi 0, %s28
      %s40 = sphi 0, %s42
      %s43 = sphi 0, %s40
      %s44 = sphi 0, %s43
      %s60 = sphi 0, %s44
      %s68 = sphi 0, %s70
      %s71 = sphi 0, %s68
      %s72 = sphi 0, %s71
      %s88 = sphi 0, %s72
      %s96 = sphi 0, %s98
      %s99 = sphi 0, %s96
      %s100 = sphi 0, %s99
      %s116 = sphi 0, %s100
      %s124 = sphi 0, %s126
      %s127 = sphi 0, %s124
      %s128 = sphi 0, %s127
      %s144 = sphi 0, %s128
    $region4: #{_lambda_.1} parent=1 // loop_header_branch
      %21 = sbr.rel (%p19) target = $region8
    $region5: #{_lambda_.1} parent=1 // loop_body
      %s23 = ssub.s32 %s18, 1
      %s24 = ssub.s32 %s18, 2
      %s31 = sadd.s32 1, %s26
      %p32 = scmp.ge.s32.totalorder %s31, 1
      %s33 = scalar_select %p32, 0, %s31
      %s34 = sadd.s32 1, %s25
      %s35 = scalar_select %p32, %s34, %s25
      %p36 = scmp.ge.s32.totalorder %s35, 3
      %s37 = scalar_select %p36, 0, %s35
      %s38 = ssub.s32 %s25, %s37
      %p39 = scmp.eq.s32.totalorder %s38, 0
      %s41 = sadd.s32 %s40, 1
      %s42 = scalar_select %p39, %s40, %s41
      %p45 = pneg %p39
      %p46 = scmp.eq.s32.totalorder %s18, 2
      %p47 = por %p45, %p46
      %p48 = scmp.ne.s32.totalorder %s40, %s43
      %p49 = scmp.eq.s32.totalorder %s18, 0
      %p50 = por %p48, %p49
      %p51 = scmp.ne.s32.totalorder %s40, %s43
      %p52 = scmp.eq.s32.totalorder %s23, 2
      %p53 = por %p51, %p52
      %p54 = scmp.ne.s32.totalorder %s43, %s44
      %p55 = scmp.eq.s32.totalorder %s23, 0
      %p56 = por %p54, %p55
      %p57 = scmp.ne.s32.totalorder %s43, %s44
      %p58 = scmp.eq.s32.totalorder %s24, 2
      %p59 = por %p57, %p58
      %p61 = scmp.ne.s32.totalorder %s44, %s60
      %p62 = scmp.eq.s32.totalorder %s24, 0
      %p63 = por %p61, %p62
      %s64 = ssub.s32 %s25, %s37
      %s65 = ssub.s32 %s26, %s33
      %s66 = sor.u32 %s64, %s65
      %p67 = scmp.eq.s32.totalorder %s66, 0
      %s69 = sadd.s32 %s68, 1
      %s70 = scalar_select %p67, %s68, %s69
      %p73 = pneg %p67
      %p74 = scmp.eq.s32.totalorder %s18, 2
      %p75 = por %p73, %p74
      %p76 = scmp.ne.s32.totalorder %s68, %s71
      %p77 = scmp.eq.s32.totalorder %s18, 0
      %p78 = por %p76, %p77
      %p79 = scmp.ne.s32.totalorder %s68, %s71
      %p80 = scmp.eq.s32.totalorder %s23, 2
      %p81 = por %p79, %p80
      %p82 = scmp.ne.s32.totalorder %s71, %s72
      %p83 = scmp.eq.s32.totalorder %s23, 0
      %p84 = por %p82, %p83
      %p85 = scmp.ne.s32.totalorder %s71, %s72
      %p86 = scmp.eq.s32.totalorder %s24, 2
      %p87 = por %p85, %p86
      %p89 = scmp.ne.s32.totalorder %s72, %s88
      %p90 = scmp.eq.s32.totalorder %s24, 0
      %p91 = por %p89, %p90
      %s92 = ssub.s32 %s25, %s37
      %s93 = ssub.s32 %s26, %s33
      %s94 = sor.u32 %s92, %s93
      %p95 = scmp.eq.s32.totalorder %s94, 0
      %s97 = sadd.s32 %s96, 1
      %s98 = scalar_select %p95, %s96, %s97
      %p101 = pneg %p95
      %p102 = scmp.eq.s32.totalorder %s18, 2
      %p103 = por %p101, %p102
      %p104 = scmp.ne.s32.totalorder %s96, %s99
      %p105 = scmp.eq.s32.totalorder %s18, 0
      %p106 = por %p104, %p105
      %p107 = scmp.ne.s32.totalorder %s96, %s99
      %p108 = scmp.eq.s32.totalorder %s23, 2
      %p109 = por %p107, %p108
      %p110 = scmp.ne.s32.totalorder %s99, %s100
      %p111 = scmp.eq.s32.totalorder %s23, 0
      %p112 = por %p110, %p111
      %p113 = scmp.ne.s32.totalorder %s99, %s100
      %p114 = scmp.eq.s32.totalorder %s24, 2
      %p115 = por %p113, %p114
      %p117 = scmp.ne.s32.totalorder %s100, %s116
      %p118 = scmp.eq.s32.totalorder %s24, 0
      %p119 = por %p117, %p118
      %s120 = ssub.s32 %s25, %s37
      %s121 = ssub.s32 %s26, %s33
      %s122 = sor.u32 %s120, %s121
      %p123 = scmp.eq.s32.totalorder %s122, 0
      %s125 = sadd.s32 %s124, 1
      %s126 = scalar_select %p123, %s124, %s125
      %p129 = pneg %p123
      %p130 = scmp.eq.s32.totalorder %s18, 2
      %p131 = por %p129, %p130
      %p132 = scmp.ne.s32.totalorder %s124, %s127
      %p133 = scmp.eq.s32.totalorder %s18, 0
      %p134 = por %p132, %p133
      %p135 = scmp.ne.s32.totalorder %s124, %s127
      %p136 = scmp.eq.s32.totalorder %s23, 2
      %p137 = por %p135, %p136
      %p138 = scmp.ne.s32.totalorder %s127, %s128
      %p139 = scmp.eq.s32.totalorder %s23, 0
      %p140 = por %p138, %p139
      %p141 = scmp.ne.s32.totalorder %s127, %s128
      %p142 = scmp.eq.s32.totalorder %s24, 2
      %p143 = por %p141, %p142
      %p145 = scmp.ne.s32.totalorder %s128, %s144
      %p146 = scmp.eq.s32.totalorder %s24, 0
      %p147 = por %p145, %p146
      %p148 = scmp.le.s32.totalorder 1, %s18
      %p149 = scmp.lt.s32.totalorder %s18, 4
      %p150 = pnand %p148, %p149
      %p151 = pneg %p150
      // Predicated region
      $region9: #{_lambda_.1} parent=5 // pred_check
        _
      $region10: #{_lambda_.1} parent=5 // pred_check_branch
        %153 = sbr.rel (%p150) target = $region12
      $region11: #{_lambda_.1} parent=5 // pred_region
        %s154 = ssub.s32 %s18, 1
      $region12: #{_lambda_.1} parent=5 // pred_fallthru
        _
      %p155 = scmp.lt.s32.totalorder %s18, 3
      // Predicated region
      $region13: #{_lambda_.1} parent=5 // pred_check
        %p156 = pneg %p155
      $region14: #{_lambda_.1} parent=5 // pred_check_branch
        %158 = sbr.rel (%p156) target = $region16
      $region15: #{_lambda_.1} parent=5 // pred_region
        // Predicated region
        $region17: #{_lambda_.1} parent=15 // pred_check
          %p159 = pneg %p50
        $region18: #{_lambda_.1} parent=15 // pred_check_branch
          %161 = sbr.rel (%p159) target = $region20
        $region19: #{_lambda_.1} parent=15 // pred_region
          %s162 = sand.u32 %s40, 1
          %s163 = scalar_lea.sflag [#allocation3], %s162
          %s164 = sand.u32 %s40, 1
          %s165 = smul.addr %s164, 32
          %s166 = scalar_lea.vmem [#allocation2], %s165
          %s168 = ssub.s32 512, 512
          %169 = vsyncadd %s163, %s168
          %s170 = smul.addr %s25, 4
          %s171 = smul.addr %s170, 128
          %s172 = scalar_lea.hbm %s0, %s171
          %s173 = sshll.u32 %s166, 4
          %s174 = int_to_ptr.vmem [resolvable:$true] %s173
          %179 = dma.hbm_to_vmem [thread:$0]  %s172, 512, %s174, %s163, 128, 128, 8
        $region20: #{_lambda_.1} parent=15 // pred_fallthru
          _
        // Predicated region
        $region21: #{_lambda_.1} parent=15 // pred_check
          %p180 = pneg %p78
        $region22: #{_lambda_.1} parent=15 // pred_check_branch
          %182 = sbr.rel (%p180) target = $region24
        $region23: #{_lambda_.1} parent=15 // pred_region
          %s183 = sand.u32 %s18, 1
          %s184 = scalar_lea.sflag [#allocation6], %s183
          %s185 = sand.u32 %s68, 1
          %s186 = scalar_lea.vmem [#allocation5], %s185
          %s188 = ssub.s32 16, 16
          %189 = vsyncadd %s184, %s188
          %s190 = sadd.s32 %s26, %s25
          %s191 = smul.addr %s190, 16
          %s192 = scalar_lea.hbm %s1, %s191
          %s194 = sshll.u32 %s186, 4
          %s195 = int_to_ptr.vmem [resolvable:$true] %s194
          %197 = dma.hbm_to_vmem [thread:$0]  %s192, 16, %s195, %s184
        $region24: #{_lambda_.1} parent=15 // pred_fallthru
          _
        // Predicated region
        $region25: #{_lambda_.1} parent=15 // pred_check
          %p198 = pneg %p106
        $region26: #{_lambda_.1} parent=15 // pred_check_branch
          %200 = sbr.rel (%p198) target = $region28
        $region27: #{_lambda_.1} parent=15 // pred_region
          %s201 = sand.u32 %s18, 1
          %s202 = scalar_lea.sflag [#allocation6], %s201
          %s203 = sand.u32 %s96, 1
          %s204 = smul.addr %s203, 32
          %s205 = scalar_lea.vmem [#allocation7], %s204
          %s207 = ssub.s32 512, 512
          %208 = vsyncadd %s202, %s207
          %s209 = smul.addr %s25, 4
          %s210 = sadd.s32 %s26, %s209
          %s211 = smul.addr %s210, 128
          %s212 = scalar_lea.hbm %s2, %s211
          %s213 = sshll.u32 %s205, 4
          %s214 = int_to_ptr.vmem [resolvable:$true] %s213
          %219 = dma.hbm_to_vmem [thread:$0]  %s212, 512, %s214, %s202, 128, 128, 8
        $region28: #{_lambda_.1} parent=15 // pred_fallthru
          _
      $region16: #{_lambda_.1} parent=5 // pred_fallthru
        _
      %p220 = scmp.le.s32.totalorder 1, %s18
      %p221 = scmp.lt.s32.totalorder %s18, 4
      %p222 = pnand %p220, %p221
      %p223 = pneg %p222
      // Predicated region
      $region29: #{_lambda_.1} parent=5 // pred_check
        _
      $region30: #{_lambda_.1} parent=5 // pred_check_branch
        %225 = sbr.rel (%p222) target = $region32
      $region31: #{_lambda_.1} parent=5 // pred_region
        %s226 = ssub.s32 %s18, 1
        %s227 = sand.u32 %s43, 1
        %s228 = scalar_lea.sflag [#allocation3], %s227
        %s229 = sand.u32 %s43, 1
        %s230 = smul.addr %s229, 32
        %s231 = scalar_lea.vmem [#allocation2], %s230
        // Predicated region
        $region33: #{_lambda_.1} parent=31 // pred_check
          %p232 = pneg %p56
        $region34: #{_lambda_.1} parent=31 // pred_check_branch
          %234 = sbr.rel (%p232) target = $region36
        $region35: #{_lambda_.1} parent=31 // pred_region
          %235 = dma.done %s228, 512
        $region36: #{_lambda_.1} parent=31 // pred_fallthru
          _
        %s236 = sand.u32 %s23, 1
        %s237 = scalar_lea.sflag [#allocation6], %s236
        %s238 = sand.u32 %s71, 1
        %s239 = scalar_lea.vmem [#allocation5], %s238
        // Predicated region
        $region37: #{_lambda_.1} parent=31 // pred_check
          %p240 = pneg %p84
        $region38: #{_lambda_.1} parent=31 // pred_check_branch
          %242 = sbr.rel (%p240) target = $region40
        $region39: #{_lambda_.1} parent=31 // pred_region
          %243 = dma.done %s237, 16
        $region40: #{_lambda_.1} parent=31 // pred_fallthru
          _
        %s244 = sand.u32 %s23, 1
        %s245 = scalar_lea.sflag [#allocation6], %s244
        %s246 = sand.u32 %s99, 1
        %s247 = smul.addr %s246, 32
        %s248 = scalar_lea.vmem [#allocation7], %s247
        // Predicated region
        $region41: #{_lambda_.1} parent=31 // pred_check
          %p249 = pneg %p112
        $region42: #{_lambda_.1} parent=31 // pred_check_branch
          %251 = sbr.rel (%p249) target = $region44
        $region43: #{_lambda_.1} parent=31 // pred_region
          %252 = dma.done %s245, 512
        $region44: #{_lambda_.1} parent=31 // pred_fallthru
          _
        %s253 = sand.u32 %s43, 1
        %s254 = scalar_lea.sflag [#allocation3], %s253
        %s255 = sand.u32 %s43, 1
        %s256 = smul.addr %s255, 32
        %s257 = scalar_lea.vmem [#allocation2], %s256
        %p258 = pneg %p56
        %p259 = pneg %p53
        %s260 = sand.u32 %s23, 1
        %s261 = scalar_lea.sflag [#allocation6], %s260
        %s262 = sand.u32 %s71, 1
        %s263 = scalar_lea.vmem [#allocation5], %s262
        %p264 = pneg %p84
        %p265 = pneg %p81
        %s266 = sand.u32 %s23, 1
        %s267 = scalar_lea.sflag [#allocation6], %s266
        %s268 = sand.u32 %s99, 1
        %s269 = smul.addr %s268, 32
        %s270 = scalar_lea.vmem [#allocation7], %s269
        %p271 = pneg %p112
        %p272 = pneg %p109
        %p273 = pneg %p140
        %p274 = pneg %p137
        %s275 = sand.u32 %s127, 1
        %s276 = scalar_lea.sflag [#allocation4], %s275
        %s277 = sand.u32 %s127, 1
        %s278 = smul.addr %s277, 8
        %s279 = scalar_lea.vmem [#allocation8], %s278
        %v280 = vld [vmem:[%s231] sm:$0xff]
        %v281 = vld [vmem:[%s231 + $0x8] sm:$0xff]
        %v282 = vld [vmem:[%s231 + $0x10] sm:$0xff]
        %v283 = vld [vmem:[%s231 + $0x18] sm:$0xff]
        %v284 = vld [vmem:[%s239] sm:$0x1]
        %286 = vset.pattern.permute.xlu0 0
        %287 = vperm.xlu0 %286, %v280
        %v288 = vpop.permute.xlu0 %287
        %291 = vset.pattern.permute.xlu0 0
        %292 = vperm.xlu0 %291, %v281
        %v293 = vpop.permute.xlu0 %292
        %296 = vset.pattern.permute.xlu0 0
        %297 = vperm.xlu0 %296, %v282
        %v298 = vpop.permute.xlu0 %297
        %301 = vset.pattern.permute.xlu0 0
        %302 = vperm.xlu0 %301, %v283
        %v303 = vpop.permute.xlu0 %302
        %v306 = vlaneseq
        %v307 = vshrl.u32 %v306, 7
        %v308 = vsub.s32 0, %v307
        %v309 = vrot.slane %v284, %v308
        %v311 = vmul.f32 %v288, %v309
        %v312 = vmul.f32 %v293, %v309
        %v313 = vmul.f32 %v298, %v309
        %v314 = vmul.f32 %v303, %v309
        %v315 = vld [vmem:[%s248] sm:$0xff]
        %v316 = vld [vmem:[%s248 + $0x8] sm:$0xff]
        %v317 = vld [vmem:[%s248 + $0x10] sm:$0xff]
        %v318 = vld [vmem:[%s248 + $0x18] sm:$0xff]
        %v319 = vsub.f32 %v311, %v315
        %v320 = vsub.f32 %v312, %v316
        %v321 = vsub.f32 %v313, %v317
        %v322 = vsub.f32 %v314, %v318
        %v323 = vmul.f32 %v319, %v319
        %v324 = vmul.f32 %v320, %v320
        %v325 = vmul.f32 %v321, %v321
        %v326 = vmul.f32 %v322, %v322
        %v327 = vadd.f32 %v323, 0.0
        %v328 = vadd.f32 %v324, 0.0
        %v329 = vadd.f32 %v325, 0.0
        %v330 = vadd.f32 %v326, 0.0
        %v331 = vadd.f32 %v327, %v328
        %v332 = vadd.f32 %v331, %v329
        %v333 = vadd.f32 %v332, %v330
        %334 = vadd.xlane.f32.xlu0 %v333
        %v335 = vpop.xlane.xlu0 %334
        %v336 = vrot.slane %v335, 4
        %v337 = vadd.f32 %v335, %v336
        %v338 = vrot.slane %v337, 2
        %v339 = vadd.f32 %v337, %v338
        %v340 = vrot.slane %v339, 1
        %v341 = vadd.f32 %v339, %v340
        %s342 = vtos %v341
        %v343 = vstv %s342
        %344 = vst [vmem:[%s279] sm:$0xff] %v343
        %s345 = sand.u32 %s127, 1
        %s346 = scalar_lea.sflag [#allocation4], %s345
        %s347 = sand.u32 %s127, 1
        %s348 = smul.addr %s347, 8
        %s349 = scalar_lea.vmem [#allocation8], %s348
        // Predicated region
        $region45: #{_lambda_.1} parent=31 // pred_check
          %p350 = pneg %p137
        $region46: #{_lambda_.1} parent=31 // pred_check_branch
          %352 = sbr.rel (%p350) target = $region48
        $region47: #{_lambda_.1} parent=31 // pred_region
          %s354 = ssub.s32 128, 128
          %355 = vsyncadd %s346, %s354
          %s356 = sadd.s32 %s28, %s27
          %s357 = smul.addr %s356, 128
          %s358 = scalar_lea.hbm %s3, %s357
          %s360 = sshll.u32 %s349, 4
          %s361 = int_to_ptr.vmem [resolvable:$true] %s360
          %363 = dma.vmem_to_hbm [thread:$0]  %s361, 128, %s358, %s346
        $region48: #{_lambda_.1} parent=31 // pred_fallthru
          _
      $region32: #{_lambda_.1} parent=5 // pred_fallthru
        _
      %p364 = scmp.le.s32.totalorder 2, %s18
      // Predicated region
      $region49: #{_lambda_.1} parent=5 // pred_check
        %p365 = pneg %p364
      $region50: #{_lambda_.1} parent=5 // pred_check_branch
        %367 = sbr.rel (%p365) target = $region52
      $region51: #{_lambda_.1} parent=5 // pred_region
        %s368 = ssub.s32 %s18, 2
        // Predicated region
        $region53: #{_lambda_.1} parent=51 // pred_check
          %p369 = pneg %p143
        $region54: #{_lambda_.1} parent=51 // pred_check_branch
          %371 = sbr.rel (%p369) target = $region56
        $region55: #{_lambda_.1} parent=51 // pred_region
          %s372 = sand.u32 %s128, 1
          %s373 = scalar_lea.sflag [#allocation4], %s372
          %s374 = sand.u32 %s128, 1
          %s375 = smul.addr %s374, 8
          %s376 = scalar_lea.vmem [#allocation8], %s375
          %377 = dma.done %s373, 128
        $region56: #{_lambda_.1} parent=51 // pred_fallthru
          _
      $region52: #{_lambda_.1} parent=5 // pred_fallthru
        _
    $region6: #{_lambda_.1} parent=1 // loop_footer
      %s22 = sadd.s32 1, %s18
    $region7: #{_lambda_.1} parent=1 // loop_footer_branch
      %17 = sbr.rel target = $region3
    $region8: #{_lambda_.1} parent=1 // loop_exit
      _
    %378 = vsyncpa [#allocation3], 1
    %s379 = scalar_lea.sflag [#allocation3], 1
    %380 = vsyncpa %s379, 1
    %381 = vsyncpa [#allocation6], 1
    %s382 = scalar_lea.sflag [#allocation6], 1
    %383 = vsyncpa %s382, 1
    %384 = vsyncpa [#allocation4], 1
    %s385 = scalar_lea.sflag [#allocation4], 1
    %386 = vsyncpa %s385, 1

</llo_original>
